<compile_context>
chip_gen: v7x
topology: tpu7x:2x2x1
jax: 0.10.0
libtpu: 0.0.40
codegen_flags: <defaults>
</compile_context>

<pallas_src>
import functools

import jax
import jax.numpy as jnp
from jax.experimental import pallas as pl
from jax.experimental.pallas import tpu as pltpu

EPS = 1e-5

_DEFAULT_VMEM_CAPACITY = 64 * 1024 * 1024  # v7x per-TC size: safe lower bound


@functools.lru_cache(maxsize=None)
def _vmem_capacity_bytes():
    try:
        info = pltpu.get_tpu_info()
        return int(getattr(info, "vmem_capacity_bytes", _DEFAULT_VMEM_CAPACITY))
    except Exception:  # interpret mode / older runtime
        return _DEFAULT_VMEM_CAPACITY


def _tile_budget_bytes():
    # ~60% of physical VMEM for our tiles (~38 MiB v7x, ~77 MiB v5e/v6e);
    # the rest is headroom for Mosaic-internal scratch.
    return min(int(_vmem_capacity_bytes() * 0.6), 80 * 1024 * 1024)


def _compiler_params(dimension_semantics):
    # Raise the scoped-VMEM limit explicitly (v5e default is only 16 MiB).
    limit = min(int(_vmem_capacity_bytes() * 0.9), 100 * 1024 * 1024)
    return pltpu.CompilerParams(
        dimension_semantics=dimension_semantics,
        vmem_limit_bytes=limit,
    )


# ----------------------------------------------------------------------------
# Fused path: one (N, TILE_D) channel strip per grid step, full N resident.
# ----------------------------------------------------------------------------
def _bn_fused_kernel(x_ref, gamma_ref, beta_ref, o_ref):
    n = x_ref.shape[0]
    inv_n = jnp.float32(1.0 / n)

    # Pass 1 over x_ref: per-channel mean (f32 accumulation).
    mean = jnp.sum(x_ref[...].astype(jnp.float32), axis=0, keepdims=True) * inv_n

    # Pass 2 over x_ref: biased variance (two-pass centered form, no
    # cancellation); the centered tile feeds the reduce and is not kept alive.
    diff = x_ref[...].astype(jnp.float32) - mean
    var = jnp.sum(diff * diff, axis=0, keepdims=True) * inv_n

    # Per-channel scale/shift on (1, TILE_D) vectors; rsqrt runs on the EUP.
    inv_std = jax.lax.rsqrt(var + jnp.float32(EPS))
    scale = gamma_ref[...] * inv_std
    shift = beta_ref[...] - mean * scale

    # Pass 3: streamed apply, 2 VALU ops/element, stored straight to o_ref.
    o_ref[...] = (x_ref[...].astype(jnp.float32) * scale + shift).astype(o_ref.dtype)


def _pick_tile_d(n, dim_p, itemsize, budget):
    """Lane tile for the fused path (dim_p is a multiple of 128)."""
    # Per lane column: 2x double-buffered input + 2x output strips of N rows
    # at the I/O dtype, plus one f32 strip of slack for in-kernel temporaries.
    bytes_per_lane = n * (4 * itemsize + 4)
    fit = max(128, (budget // bytes_per_lane) // 128 * 128)
    if dim_p <= 128:
        return dim_p
    # Target ~8 grid steps but keep strips >= 512 lanes when dim allows, and
    # guarantee >= 2 steps whenever dim >= 256 (v7x megacore + DMA overlap).
    target = max(512, (dim_p // 8) // 128 * 128)
    half = max(128, (dim_p // 2) // 128 * 128)
    return max(128, min(target, half, fit, dim_p))


def _bn_fused(x, gamma2d, beta2d, budget):
    n, dim_p = x.shape
    tile_d = _pick_tile_d(n, dim_p, x.dtype.itemsize, budget)
    grid = (pl.cdiv(dim_p, tile_d),)
    return pl.pallas_call(
        _bn_fused_kernel,
        out_shape=jax.ShapeDtypeStruct((n, dim_p), x.dtype),
        grid_spec=pltpu.PrefetchScalarGridSpec(
            num_scalar_prefetch=0,
            grid=grid,
            in_specs=[
                pl.BlockSpec((n, tile_d), lambda j: (0, j)),
                pl.BlockSpec((1, tile_d), lambda j: (0, j)),
                pl.BlockSpec((1, tile_d), lambda j: (0, j)),
            ],
            out_specs=pl.BlockSpec((n, tile_d), lambda j: (0, j)),
        ),
        compiler_params=_compiler_params(("parallel",)),
    )(x, gamma2d, beta2d)


# ----------------------------------------------------------------------------
# Two-pass path for large N: tile the batch axis, accumulate stats over an
# "arbitrary" N grid axis, then apply elementwise.
# ----------------------------------------------------------------------------
def _bn_stats_kernel(x_ref, sum_ref, sq_ref, *, n_total, tile_n):
    k = pl.program_id(1)

    @pl.when(k == 0)
    def _():
        sum_ref[...] = jnp.zeros_like(sum_ref)
        sq_ref[...] = jnp.zeros_like(sq_ref)

    x = x_ref[...].astype(jnp.float32)
    # Mask rows past the true batch size (last, partial N block).
    row = k * tile_n + jax.lax.broadcasted_iota(jnp.int32, x.shape, 0)
    x = jnp.where(row < n_total, x, 0.0)
    sum_ref[...] += jnp.sum(x, axis=0, keepdims=True)
    sq_ref[...] += jnp.sum(x * x, axis=0, keepdims=True)


def _bn_apply_kernel(x_ref, scale_ref, shift_ref, o_ref):
    o_ref[...] = (x_ref[...].astype(jnp.float32) * scale_ref[...]
                  + shift_ref[...]).astype(o_ref.dtype)


def _pick_fallback_tiles(n, dim_p, itemsize, budget):
    tile_d = min(dim_p, 512)
    bytes_per_row = tile_d * (4 * itemsize + 4)
    tile_n = (budget // bytes_per_row) // 8 * 8
    tile_n = min(tile_n, 4096, max(8, (n // 8) * 8))
    return max(8, tile_n), tile_d


def _bn_two_pass(x, gamma2d, beta2d, budget):
    n, dim_p = x.shape
    tile_n, tile_d = _pick_fallback_tiles(n, dim_p, x.dtype.itemsize, budget)
    d_tiles, n_tiles = pl.cdiv(dim_p, tile_d), pl.cdiv(n, tile_n)

    s, sq = pl.pallas_call(
        functools.partial(_bn_stats_kernel, n_total=n, tile_n=tile_n),
        out_shape=(jax.ShapeDtypeStruct((1, dim_p), jnp.float32),
                   jax.ShapeDtypeStruct((1, dim_p), jnp.float32)),
        grid_spec=pltpu.PrefetchScalarGridSpec(
            num_scalar_prefetch=0,
            grid=(d_tiles, n_tiles),
            in_specs=[pl.BlockSpec((tile_n, tile_d), lambda j, k: (k, j))],
            out_specs=(pl.BlockSpec((1, tile_d), lambda j, k: (0, j)),
                       pl.BlockSpec((1, tile_d), lambda j, k: (0, j))),
        ),
        compiler_params=_compiler_params(("parallel", "arbitrary")),
    )(x)

    inv_n = jnp.float32(1.0 / n)
    mean = s * inv_n
    # Single-pass variance E[x^2] - mean^2; clamp at 0 against cancellation
    # when |mean| is large relative to the spread.
    var = jnp.maximum(sq * inv_n - mean * mean, 0.0)
    inv_std = jax.lax.rsqrt(var + jnp.float32(EPS))
    scale = gamma2d * inv_std
    shift = beta2d - mean * scale

    return pl.pallas_call(
        _bn_apply_kernel,
        out_shape=jax.ShapeDtypeStruct((n, dim_p), x.dtype),
        grid_spec=pltpu.PrefetchScalarGridSpec(
            num_scalar_prefetch=0,
            grid=(d_tiles, n_tiles),
            in_specs=[
                pl.BlockSpec((tile_n, tile_d), lambda j, k: (k, j)),
                pl.BlockSpec((1, tile_d), lambda j, k: (0, j)),
                pl.BlockSpec((1, tile_d), lambda j, k: (0, j)),
            ],
            out_specs=pl.BlockSpec((tile_n, tile_d), lambda j, k: (k, j)),
        ),
        compiler_params=_compiler_params(("parallel", "parallel")),
    )(x, scale, shift)


# ----------------------------------------------------------------------------
# Public wrapper.
# ----------------------------------------------------------------------------
@functools.partial(jax.jit, static_argnames=("force_two_pass",))
def linear_batch_norm(x, gamma, beta, *, force_two_pass=False):
    """Training-mode LinearBatchNorm forward.  x: (N, dim); gamma/beta: (dim,)."""
    n, dim = x.shape
    budget = _tile_budget_bytes()

    gamma2d = gamma.reshape(1, dim).astype(jnp.float32)
    beta2d = beta.reshape(1, dim).astype(jnp.float32)

    # Lane-dense padding of the channel axis (unmasked full-width stores).
    dpad = (-dim) % 128
    if dpad:
        x = jnp.pad(x, ((0, 0), (0, dpad)))
        gamma2d = jnp.pad(gamma2d, ((0, 0), (0, dpad)), constant_values=1.0)
        beta2d = jnp.pad(beta2d, ((0, 0), (0, dpad)))

    # Fused single-kernel path needs at least one 128-lane, full-N strip
    # (double-buffered in/out + f32 slack) inside the VMEM tile budget.
    strip_bytes = n * (4 * x.dtype.itemsize + 4) * 128
    if force_two_pass or strip_bytes > budget:
        out = _bn_two_pass(x, gamma2d, beta2d, budget)
    else:
        out = _bn_fused(x, gamma2d, beta2d, budget)

    return out[:, :dim] if dpad else out


def linear_batch_norm_ref(x, gamma, beta):
    """Pure-JAX reference matching PyTorch BatchNorm2d training forward."""
    xf = x.astype(jnp.float32)
    mean = jnp.mean(xf, axis=0, keepdims=True)
    var = jnp.mean((xf - mean) ** 2, axis=0, keepdims=True)  # biased
    y = (xf - mean) / jnp.sqrt(var + EPS)
    return (y * gamma[None, :] + beta[None, :]).astype(x.dtype)


# TODO(synk): running_mean / running_var state tracking (momentum) and SyncBN
# cross-replica reduction are module state / collectives, not part of this
# single-device forward kernel.

if __name__ == "__main__":
    key = jax.random.PRNGKey(0)
    k1, k2, k3, k4, k5 = jax.random.split(key, 5)

    # Case 1: tiny hidden dim (dim=32) -> padded to 128, fused path, grid=(1,).
    N1, D1 = 8, 32
    x1 = jax.random.normal(k1, (N1, D1), dtype=jnp.float32)
    g1 = jnp.ones((D1,), dtype=jnp.float32)   # BatchNorm2d affine init: weight=1
    b1 = jnp.zeros((D1,), dtype=jnp.float32)  # bias=0
    out1 = jax.block_until_ready(linear_batch_norm(x1, g1, b1))
    ref1 = linear_batch_norm_ref(x1, g1, b1)
    assert out1.shape == (N1, D1)
    assert jnp.allclose(out1, ref1, atol=1e-5, rtol=1e-5), "mismatch (dim=32)"

    # Case 2: lane-dense multi-tile fused path (dim=512 -> tile 256, grid=(2,)).
    N2, D2 = 16, 512
    x2 = jax.random.normal(k2, (N2, D2), dtype=jnp.float32)
    g2 = jax.random.normal(k3, (D2,), dtype=jnp.float32) * 0.1 + 1.0
    b2 = jax.random.normal(k4, (D2,), dtype=jnp.float32) * 0.1
    out2 = jax.block_until_ready(linear_batch_norm(x2, g2, b2))
    ref2 = linear_batch_norm_ref(x2, g2, b2)
    assert out2.shape == (N2, D2)
    assert jnp.allclose(out2, ref2, atol=1e-5, rtol=1e-5), "mismatch (dim=512)"

    # Case 3: force the large-batch two-pass path (N-tiled accumulator kernel,
    # masked partial N block) at a small shape to verify it end-to-end.
    N3, D3 = 20, 384
    x3 = jax.random.normal(k5, (N3, D3), dtype=jnp.float32) * 2.0 + 0.5
    g3 = jnp.ones((D3,), dtype=jnp.float32)
    b3 = jnp.zeros((D3,), dtype=jnp.float32)
    out3 = jax.block_until_ready(
        linear_batch_norm(x3, g3, b3, force_two_pass=True))
    ref3 = linear_batch_norm_ref(x3, g3, b3)
    assert out3.shape == (N3, D3)
    assert jnp.allclose(out3, ref3, atol=1e-4, rtol=1e-4), "mismatch (two-pass)"

    print("KERNEL_OK")
</pallas_src>

<mosaic_0001>
module attributes {stable_mosaic.version = 11 : i64} {
  func.func @_bn_fused_kernel(%arg0: i32, %arg1: memref<8x128xf32, #tpu.memory_space<vmem>>, %arg2: memref<1x128xf32, #tpu.memory_space<vmem>>, %arg3: memref<1x128xf32, #tpu.memory_space<vmem>>, %arg4: memref<8x128xf32, #tpu.memory_space<vmem>>) attributes {dimension_semantics = [#tpu.dimension_semantics<parallel>], iteration_bounds = array<i64: 1>, scalar_prefetch = 0 : i64, scratch_operands = 0 : i64, tpu.core_type = #tpu.core_type<tc>, window_params = [{transform_indices = @transform_0, window_bounds = array<i64: 8, 128>}, {transform_indices = @transform_1, window_bounds = array<i64: 1, 128>}, {transform_indices = @transform_2, window_bounds = array<i64: 1, 128>}, {transform_indices = @transform_3, window_bounds = array<i64: 8, 128>}]} {
    %c0 = arith.constant 0 : index
    %c0_0 = arith.constant 0 : index
    %0 = vector.load %arg1[%c0, %c0_0] : memref<8x128xf32, #tpu.memory_space<vmem>>, vector<8x128xf32>
    %cst = arith.constant dense<0.000000e+00> : vector<128xf32>
    %1 = vector.multi_reduction <add>, %0, %cst [0] : vector<8x128xf32> to vector<128xf32>
    %2 = vector.shape_cast %1 : vector<128xf32> to vector<1x128xf32>
    %cst_1 = arith.constant 1.250000e-01 : f32
    %3 = vector.broadcast %cst_1 : f32 to vector<1x128xf32>
    %4 = arith.mulf %2, %3 : vector<1x128xf32>
    %c0_2 = arith.constant 0 : index
    %c0_3 = arith.constant 0 : index
    %5 = vector.load %arg1[%c0_2, %c0_3] : memref<8x128xf32, #tpu.memory_space<vmem>>, vector<8x128xf32>
    %6 = vector.broadcast %4 : vector<1x128xf32> to vector<8x128xf32>
    %7 = arith.subf %5, %6 : vector<8x128xf32>
    %8 = arith.mulf %7, %7 : vector<8x128xf32>
    %cst_4 = arith.constant dense<0.000000e+00> : vector<128xf32>
    %9 = vector.multi_reduction <add>, %8, %cst_4 [0] : vector<8x128xf32> to vector<128xf32>
    %10 = vector.shape_cast %9 : vector<128xf32> to vector<1x128xf32>
    %cst_5 = arith.constant 1.250000e-01 : f32
    %11 = vector.broadcast %cst_5 : f32 to vector<1x128xf32>
    %12 = arith.mulf %10, %11 : vector<1x128xf32>
    %cst_6 = arith.constant 9.99999974E-6 : f32
    %13 = vector.broadcast %cst_6 : f32 to vector<1x128xf32>
    %14 = arith.addf %12, %13 : vector<1x128xf32>
    %15 = math.rsqrt %14 : vector<1x128xf32>
    %c0_7 = arith.constant 0 : index
    %c0_8 = arith.constant 0 : index
    %16 = vector.load %arg2[%c0_7, %c0_8] : memref<1x128xf32, #tpu.memory_space<vmem>>, vector<1x128xf32>
    %17 = arith.mulf %16, %15 : vector<1x128xf32>
    %c0_9 = arith.constant 0 : index
    %c0_10 = arith.constant 0 : index
    %18 = vector.load %arg3[%c0_9, %c0_10] : memref<1x128xf32, #tpu.memory_space<vmem>>, vector<1x128xf32>
    %19 = arith.mulf %4, %17 : vector<1x128xf32>
    %20 = arith.subf %18, %19 : vector<1x128xf32>
    %c0_11 = arith.constant 0 : index
    %c0_12 = arith.constant 0 : index
    %21 = vector.load %arg1[%c0_11, %c0_12] : memref<8x128xf32, #tpu.memory_space<vmem>>, vector<8x128xf32>
    %22 = vector.broadcast %17 : vector<1x128xf32> to vector<8x128xf32>
    %23 = arith.mulf %21, %22 : vector<8x128xf32>
    %24 = vector.broadcast %20 : vector<1x128xf32> to vector<8x128xf32>
    %25 = arith.addf %23, %24 : vector<8x128xf32>
    %c0_13 = arith.constant 0 : index
    %c0_14 = arith.constant 0 : index
    %26 = vector.load %arg4[%c0_13, %c0_14] : memref<8x128xf32, #tpu.memory_space<vmem>>, vector<8x128xf32>
    tpu.vector_store %arg4[%c0_13, %c0_14], %25 {strides = array<i32>} : memref<8x128xf32, #tpu.memory_space<vmem>>, vector<8x128xf32>,
    return
  }
  func.func @transform_0(%arg0: i32) -> (i32, i32) {
    %c0_i32 = arith.constant 0 : i32
    %c0_i32_0 = arith.constant 0 : i32
    return %c0_i32, %arg0 : i32, i32
  }
  func.func @transform_1(%arg0: i32) -> (i32, i32) {
    %c0_i32 = arith.constant 0 : i32
    %c0_i32_0 = arith.constant 0 : i32
    return %c0_i32, %arg0 : i32, i32
  }
  func.func @transform_2(%arg0: i32) -> (i32, i32) {
    %c0_i32 = arith.constant 0 : i32
    %c0_i32_0 = arith.constant 0 : i32
    return %c0_i32, %arg0 : i32, i32
  }
  func.func @transform_3(%arg0: i32) -> (i32, i32) {
    %c0_i32 = arith.constant 0 : i32
    %c0_i32_0 = arith.constant 0 : i32
    return %c0_i32, %arg0 : i32, i32
  }
}

</mosaic_0001>

<llo_original>
// kernel: linear_batch_norm.1
$region0: #{linear_batch_norm.1}
  #allocation0 [shape = 'u32[]', space=smem, size = 0x4, offset = 0x4, fixed_abs, tag = 'smem constant byte address 0x4 - core index']
  #allocation1 [shape = 'u32[144,128]{1,0:T(1,128)}', space=vmem, size = 0x12000, scoped, tag = 'internal scratch']
  %s0 = inlined_call_operand.vmem [shape: f32[8,128], index: 0, kind: input, shape index: {}]
  %s1 = inlined_call_operand.vmem [shape: f32[1,128], index: 1, kind: input, shape index: {}]
  %s2 = inlined_call_operand.vmem [shape: f32[1,128], index: 2, kind: input, shape index: {}]
  %s3 = inlined_call_operand.hbm [shape: f32[8,128], index: 3, kind: output, shape index: {}]
  %s4 = sld [smem:[#allocation0]]
  $region22: #{linear_batch_norm.1} parent=0
    _
  %s6 = ssub.s32 1, %s4
  %s7 = scalar_select 0, %s6, %s4
  $region1: #{linear_batch_norm.1} parent=0
    #allocation2 [shape = 'u8[4096]{0}', space=vmem, size = 0x1000, scoped, tag = 'output window, operand 0, single buffered']
    #allocation3 [shape = 's32[1]{0}', space=sflag, size = 0x4, scoped, tag = 'scoped memory for linear_batch_norm.1']
    %8 = vsyncpa [#allocation3], 0
    // Predicated region
    $region2: #{linear_batch_norm.1} parent=1 // pred_check
      _
    $region3: #{linear_batch_norm.1} parent=1 // pred_check_branch
      %10 = sbr.rel (0) target = $region5
    $region4: #{linear_batch_norm.1} parent=1 // pred_region
      _
    $region5: #{linear_batch_norm.1} parent=1 // pred_fallthru
      _
    // Predicated region
    $region6: #{linear_batch_norm.1} parent=1 // pred_check
      _
    $region7: #{linear_batch_norm.1} parent=1 // pred_check_branch
      %12 = sbr.rel (0) target = $region9
    $region8: #{linear_batch_norm.1} parent=1 // pred_region
      _
    $region9: #{linear_batch_norm.1} parent=1 // pred_fallthru
      _
    // Predicated region
    $region10: #{linear_batch_norm.1} parent=1 // pred_check
      _
    $region11: #{linear_batch_norm.1} parent=1 // pred_check_branch
      %14 = sbr.rel (0) target = $region13
    $region12: #{linear_batch_norm.1} parent=1 // pred_region
      _
    $region13: #{linear_batch_norm.1} parent=1 // pred_fallthru
      _
    %v15 = vld [vmem:[%s0] sm:$0xff]
    %v16 = vrot.slane %v15, 4
    %v17 = vadd.f32 %v15, %v16
    %v18 = vrot.slane %v17, 2
    %v19 = vadd.f32 %v17, %v18
    %v20 = vrot.slane %v19, 1
    %v21 = vadd.f32 %v19, %v20
    %v22 = vmul.f32 %v21, 0.125
    %v23 = vsub.f32 %v15, %v22
    %v24 = vmul.f32 %v23, %v23
    %v25 = vrot.slane %v24, 4
    %v26 = vadd.f32 %v24, %v25
    %v27 = vrot.slane %v26, 2
    %v28 = vadd.f32 %v26, %v27
    %v29 = vrot.slane %v28, 1
    %v30 = vadd.f32 %v28, %v29
    %v31 = vmul.f32 %v30, 0.125
    %v32 = vadd.f32 %v31, 1e-05
    %v33 = vrsqrt.pop %v32
    %v34 = vld [vmem:[%s1] sm:$0x1]
    %v35 = vmul.f32 %v34, %v33
    %v36 = vld [vmem:[%s2] sm:$0x1]
    %v37 = vmul.f32 %v22, %v35
    %v38 = vsub.f32 %v36, %v37
    %v40 = vlaneseq
    %v41 = vshrl.u32 %v40, 7
    %v42 = vsub.s32 0, %v41
    %v43 = vrot.slane %v35, %v42
    %v45 = vmul.f32 %v15, %v43
    %v47 = vlaneseq
    %v48 = vshrl.u32 %v47, 7
    %v49 = vsub.s32 0, %v48
    %v50 = vrot.slane %v38, %v49
    %v52 = vadd.f32 %v45, %v50
    %53 = vst [vmem:[#allocation2] sm:$0xff] %v52
    // Predicated region
    $region14: #{linear_batch_norm.1} parent=1 // pred_check
      _
    $region15: #{linear_batch_norm.1} parent=1 // pred_check_branch
      %55 = sbr.rel (0) target = $region17
    $region16: #{linear_batch_norm.1} parent=1 // pred_region
      %s57 = ssub.s32 128, 128
      %58 = vsyncadd [#allocation3], %s57
      %s60 = sshll.u32 [#allocation2], 4
      %s61 = int_to_ptr.vmem [resolvable:$true] %s60
      %63 = dma.vmem_to_hbm [thread:$0]  %s61, 128, %s3, [#allocation3]
    $region17: #{linear_batch_norm.1} parent=1 // pred_fallthru
      _
    // Predicated region
    $region18: #{linear_batch_norm.1} parent=1 // pred_check
      _
    $region19: #{linear_batch_norm.1} parent=1 // pred_check_branch
      %65 = sbr.rel (0) target = $region21
    $region20: #{linear_batch_norm.1} parent=1 // pred_region
      %66 = dma.done [#allocation3], 128
    $region21: #{linear_batch_norm.1} parent=1 // pred_fallthru
      _
    %67 = vsyncpa [#allocation3], 1

</llo_original>
